<compile_context>
chip_gen: v6e
topology: v6e:2x2x1
jax: 0.10.0
libtpu: 0.0.40
codegen_flags: <defaults>
</compile_context>

<pallas_src>
import math

import jax
import jax.numpy as jnp
from jax import lax
from jax.experimental import pallas as pl
from jax.experimental.pallas import tpu as pltpu

_LANES = 128
_SUBLANES = 8
_CHUNK = _SUBLANES * _LANES  # 1024


def _default_num_cores() -> int:
    """Split the grid across TensorCores only on v7x (2 TC/chip)."""
    try:
        kind = jax.devices()[0].device_kind.lower()
    except Exception:
        return 1
    return 2 if "v7" in kind else 1


def relative_l1(pred: jax.Array, target: jax.Array, *, eps: float = 0.01,
                tile_rows: int = 8192, num_cores: int | None = None) -> jax.Array:
    """RelativeL1 loss: mean(|pred/(target+eps) - target/(target+eps)|)."""
    assert pred.shape == target.shape, (pred.shape, target.shape)
    n_elems = math.prod(pred.shape)
    if num_cores is None:
        num_cores = _default_num_cores()

    isx = jnp.dtype(pred.dtype).itemsize
    ist = jnp.dtype(target.dtype).itemsize

    flat_x = pred.reshape(-1)
    flat_t = target.reshape(-1)

    n_aligned = (n_elems // _CHUNK) * _CHUNK
    rem = n_elems - n_aligned

    # <=1023-element ragged tail: one tiny plain-JAX reduce (no full-HBM pad
    # copy of the inputs).
    tail_sum = jnp.zeros((), jnp.float32)
    if rem:
        tx = flat_x[n_aligned:].astype(jnp.float32)
        tt = flat_t[n_aligned:].astype(jnp.float32)
        tail_sum = jnp.sum(jnp.abs((tx - tt) / (tt + eps)))

    if n_aligned == 0:
        return (tail_sum / n_elems).astype(jnp.float32)

    if rem:
        x2d = flat_x[:n_aligned].reshape(-1, _LANES)
        t2d = flat_t[:n_aligned].reshape(-1, _LANES)
    else:
        x2d = flat_x.reshape(-1, _LANES)
        t2d = flat_t.reshape(-1, _LANES)
    m = n_aligned // _LANES  # rows; multiple of 8, all rows hold real data

    # Row-block size: multiple of 8, clamped to the array.  8192 rows = 4 MiB
    # per f32 input block -> per-step overhead amortized to ~roofline.
    tile_rows = max(_SUBLANES, (tile_rows // _SUBLANES) * _SUBLANES)
    block_rows = min(tile_rows, m)
    nb = pl.cdiv(m, block_rows)

    # When splitting across cores, try to make nb a multiple of num_cores so
    # no core re-reads a clamp-duplicated, fully-masked block (wasted HBM BW
    # on v7x where the 2 TCs share bandwidth).
    if num_cores > 1 and nb % num_cores != 0:
        nb_target = pl.cdiv(nb, num_cores) * num_cores
        br = max(_SUBLANES,
                 ((pl.cdiv(m, nb_target) + _SUBLANES - 1) // _SUBLANES) * _SUBLANES)
        if pl.cdiv(m, br) % num_cores == 0:
            block_rows = br
            nb = pl.cdiv(m, br)
    nbpc = pl.cdiv(nb, num_cores)  # blocks per core

    def kernel(x_ref, t_ref, o_ref):
        c = pl.program_id(0)
        i = pl.program_id(1)

        @pl.when(i == 0)
        def _():
            o_ref[...] = jnp.zeros_like(o_ref)

        x = x_ref[...].astype(jnp.float32)
        t = t_ref[...].astype(jnp.float32)
        base = t + eps
        # |x/b - t/b| == |x - t| / b : one EUP reciprocal instead of two divides.
        val = jnp.abs((x - t) / base)

        start_row = (c * nbpc + i) * block_rows
        needs_mask = start_row + block_rows > m

        # Interior (full, valid) blocks: no iota / compare / select.
        @pl.when(jnp.logical_not(needs_mask))
        def _():
            # Lane-aligned reshape: (block_rows,128) -> (block_rows/8, 8, 128);
            # the (8,128) minor tile is vreg-shaped, so the sum lowers to pure
            # vreg adds (deferred cross-lane reduction).
            partial = val.reshape(-1, _SUBLANES, _LANES).sum(axis=0)
            o_ref[...] += partial[None]

        # Ragged last block / clamp-duplicated block: mask rows past the real
        # data with a select (NOT a multiply -- garbage rows may hold NaN/Inf)
        # before folding into the partial.
        @pl.when(needs_mask)
        def _():
            rows = lax.broadcasted_iota(jnp.int32, val.shape, 0) + start_row
            masked = jnp.where(rows < m, val, 0.0)
            partial = masked.reshape(-1, _SUBLANES, _LANES).sum(axis=0)
            o_ref[...] += partial[None]

    def in_map(c, i):
        # Clamp so a core whose last block index would run past the array
        # re-reads the final valid block instead; its rows are fully masked.
        return (jnp.minimum(c * nbpc + i, nb - 1), 0)

    cost = pl.CostEstimate(
        flops=4 * n_aligned,
        transcendentals=0,
        bytes_accessed=n_aligned * (isx + ist) + num_cores * _CHUNK * 4,
    )

    params = dict(dimension_semantics=("parallel", "arbitrary"))
    # Double-buffered input VMEM for both operands + accumulator/headroom.
    vmem_need = 2 * block_rows * _LANES * (isx + ist) + (2 << 20)
    if vmem_need > (12 << 20):  # conservative vs. v5e's 16 MiB scoped default
        params["vmem_limit_bytes"] = int(vmem_need + (8 << 20))

    partials = pl.pallas_call(
        kernel,
        out_shape=jax.ShapeDtypeStruct((num_cores, _SUBLANES, _LANES), jnp.float32),
        grid_spec=pltpu.PrefetchScalarGridSpec(
            num_scalar_prefetch=0,
            grid=(num_cores, nbpc),
            in_specs=[
                pl.BlockSpec((block_rows, _LANES), in_map),
                pl.BlockSpec((block_rows, _LANES), in_map),
            ],
            out_specs=pl.BlockSpec((1, _SUBLANES, _LANES), lambda c, i: (c, 0, 0)),
        ),
        compiler_params=pltpu.CompilerParams(**params),
        cost_estimate=cost,
    )(x2d, t2d)

    total = partials.sum() + tail_sum
    return (total / n_elems).astype(jnp.float32)


def _relative_l1_reference(pred: jax.Array, target: jax.Array,
                           eps: float = 0.01) -> jax.Array:
    """Plain-JAX reference matching the PyTorch module."""
    x = pred.astype(jnp.float32)
    t = target.astype(jnp.float32)
    base = t + eps
    return jnp.mean(jnp.abs(x / base - t / base))


if __name__ == "__main__":
    key = jax.random.PRNGKey(0)
    k1, k2 = jax.random.split(key)
    shape = (2, 4, 16, 16)
    pred = jax.random.uniform(k1, shape, dtype=jnp.float32)
    target = jax.random.uniform(k2, shape, dtype=jnp.float32)

    out = jax.block_until_ready(relative_l1(pred, target))
    ref = jax.block_until_ready(_relative_l1_reference(pred, target))

    assert jnp.allclose(out, ref, rtol=1e-4, atol=1e-6), (out, ref)
    print("KERNEL_OK")
</pallas_src>

<mosaic_0001>
module attributes {stable_mosaic.version = 11 : i64} {
  func.func @kernel(%arg0: i32, %arg1: i32, %arg2: memref<16x128xf32, #tpu.memory_space<vmem>>, %arg3: memref<16x128xf32, #tpu.memory_space<vmem>>, %arg4: memref<1x8x128xf32, #tpu.memory_space<vmem>>) attributes {dimension_semantics = [#tpu.dimension_semantics<parallel>, #tpu.dimension_semantics<arbitrary>], iteration_bounds = array<i64: 1, 1>, scalar_prefetch = 0 : i64, scratch_operands = 0 : i64, tpu.core_type = #tpu.core_type<tc>, window_params = [{transform_indices = @transform_0, window_bounds = array<i64: 16, 128>}, {transform_indices = @transform_1, window_bounds = array<i64: 16, 128>}, {transform_indices = @transform_2, window_bounds = array<i64: 1, 8, 128>}]} {
    %c0_i32 = arith.constant 0 : i32
    %0 = arith.cmpi eq, %arg1, %c0_i32 : i32
    %1 = arith.extui %0 : i1 to i32
    %c0_i32_0 = arith.constant 0 : i32
    %2 = arith.cmpi ne, %1, %c0_i32_0 : i32
    scf.if %2 {
      %cst_8 = arith.constant 0.000000e+00 : f32
      %20 = vector.broadcast %cst_8 : f32 to vector<1x8x128xf32>
      %c0_9 = arith.constant 0 : index
      %c0_10 = arith.constant 0 : index
      %c0_11 = arith.constant 0 : index
      %21 = vector.load %arg4[%c0_9, %c0_10, %c0_11] : memref<1x8x128xf32, #tpu.memory_space<vmem>>, vector<1x8x128xf32>
      tpu.vector_store %arg4[%c0_9, %c0_10, %c0_11], %20 {strides = array<i32>} : memref<1x8x128xf32, #tpu.memory_space<vmem>>, vector<1x8x128xf32>,
    } else {
    }
    %c0 = arith.constant 0 : index
    %c0_1 = arith.constant 0 : index
    %3 = vector.load %arg2[%c0, %c0_1] : memref<16x128xf32, #tpu.memory_space<vmem>>, vector<16x128xf32>
    %c0_2 = arith.constant 0 : index
    %c0_3 = arith.constant 0 : index
    %4 = vector.load %arg3[%c0_2, %c0_3] : memref<16x128xf32, #tpu.memory_space<vmem>>, vector<16x128xf32>
    %cst = arith.constant 0.00999999977 : f32
    %5 = vector.broadcast %cst : f32 to vector<16x128xf32>
    %6 = arith.addf %4, %5 : vector<16x128xf32>
    %7 = arith.subf %3, %4 : vector<16x128xf32>
    %8 = arith.divf %7, %6 : vector<16x128xf32>
    %9 = math.absf %8 : vector<16x128xf32>
    %c1_i32 = arith.constant 1 : i32
    %10 = arith.muli %arg0, %c1_i32 : i32
    %11 = arith.addi %10, %arg1 : i32
    %c16_i32 = arith.constant 16 : i32
    %12 = arith.muli %11, %c16_i32 : i32
    %c16_i32_4 = arith.constant 16 : i32
    %13 = arith.addi %12, %c16_i32_4 : i32
    %c16_i32_5 = arith.constant 16 : i32
    %14 = arith.cmpi sgt, %13, %c16_i32_5 : i32
    %true = arith.constant true
    %15 = arith.xori %14, %true : i1
    %16 = arith.extui %15 : i1 to i32
    %c0_i32_6 = arith.constant 0 : i32
    %17 = arith.cmpi ne, %16, %c0_i32_6 : i32
    scf.if %17 {
      %20 = vector.shape_cast %9 : vector<16x128xf32> to vector<2x8x128xf32>
      %cst_8 = arith.constant dense<0.000000e+00> : vector<8x128xf32>
      %21 = vector.multi_reduction <add>, %20, %cst_8 [0] : vector<2x8x128xf32> to vector<8x128xf32>
      %c0_9 = arith.constant 0 : index
      %c0_10 = arith.constant 0 : index
      %c0_11 = arith.constant 0 : index
      %22 = vector.load %arg4[%c0_9, %c0_10, %c0_11] : memref<1x8x128xf32, #tpu.memory_space<vmem>>, vector<1x8x128xf32>
      %23 = vector.shape_cast %21 : vector<8x128xf32> to vector<1x8x128xf32>
      %24 = arith.addf %22, %23 : vector<1x8x128xf32>
      %c0_12 = arith.constant 0 : index
      %c0_13 = arith.constant 0 : index
      %c0_14 = arith.constant 0 : index
      %25 = vector.load %arg4[%c0_12, %c0_13, %c0_14] : memref<1x8x128xf32, #tpu.memory_space<vmem>>, vector<1x8x128xf32>
      tpu.vector_store %arg4[%c0_12, %c0_13, %c0_14], %24 {strides = array<i32>} : memref<1x8x128xf32, #tpu.memory_space<vmem>>, vector<1x8x128xf32>,
    } else {
    }
    %18 = arith.extui %14 : i1 to i32
    %c0_i32_7 = arith.constant 0 : i32
    %19 = arith.cmpi ne, %18, %c0_i32_7 : i32
    scf.if %19 {
      %20 = tpu.iota {dimensions = array<i32: 0>} : vector<16x128xi32>
      %21 = vector.broadcast %12 : i32 to vector<16x128xi32>
      %22 = arith.addi %20, %21 : vector<16x128xi32>
      %c16_i32_8 = arith.constant 16 : i32
      %23 = vector.broadcast %c16_i32_8 : i32 to vector<16x128xi32>
      %24 = arith.cmpi slt, %22, %23 : vector<16x128xi32>
      %cst_9 = arith.constant 0.000000e+00 : f32
      %25 = vector.broadcast %cst_9 : f32 to vector<16x128xf32>
      %26 = arith.select %24, %9, %25 : vector<16x128xi1>, vector<16x128xf32>
      %27 = vector.shape_cast %26 : vector<16x128xf32> to vector<2x8x128xf32>
      %cst_10 = arith.constant dense<0.000000e+00> : vector<8x128xf32>
      %28 = vector.multi_reduction <add>, %27, %cst_10 [0] : vector<2x8x128xf32> to vector<8x128xf32>
      %c0_11 = arith.constant 0 : index
      %c0_12 = arith.constant 0 : index
      %c0_13 = arith.constant 0 : index
      %29 = vector.load %arg4[%c0_11, %c0_12, %c0_13] : memref<1x8x128xf32, #tpu.memory_space<vmem>>, vector<1x8x128xf32>
      %30 = vector.shape_cast %28 : vector<8x128xf32> to vector<1x8x128xf32>
      %31 = arith.addf %29, %30 : vector<1x8x128xf32>
      %c0_14 = arith.constant 0 : index
      %c0_15 = arith.constant 0 : index
      %c0_16 = arith.constant 0 : index
      %32 = vector.load %arg4[%c0_14, %c0_15, %c0_16] : memref<1x8x128xf32, #tpu.memory_space<vmem>>, vector<1x8x128xf32>
      tpu.vector_store %arg4[%c0_14, %c0_15, %c0_16], %31 {strides = array<i32>} : memref<1x8x128xf32, #tpu.memory_space<vmem>>, vector<1x8x128xf32>,
    } else {
    }
    return
  }
  func.func @transform_0(%arg0: i32, %arg1: i32) -> (i32, i32) {
    %c1_i32 = arith.constant 1 : i32
    %0 = arith.muli %arg0, %c1_i32 : i32
    %1 = arith.addi %0, %arg1 : i32
    %c0_i32 = arith.constant 0 : i32
    %2 = arith.minsi %1, %c0_i32 : i32
    %c0_i32_0 = arith.constant 0 : i32
    %c0_i32_1 = arith.constant 0 : i32
    return %2, %c0_i32_0 : i32, i32
  }
  func.func @transform_1(%arg0: i32, %arg1: i32) -> (i32, i32) {
    %c1_i32 = arith.constant 1 : i32
    %0 = arith.muli %arg0, %c1_i32 : i32
    %1 = arith.addi %0, %arg1 : i32
    %c0_i32 = arith.constant 0 : i32
    %2 = arith.minsi %1, %c0_i32 : i32
    %c0_i32_0 = arith.constant 0 : i32
    %c0_i32_1 = arith.constant 0 : i32
    return %2, %c0_i32_0 : i32, i32
  }
  func.func @transform_2(%arg0: i32, %arg1: i32) -> (i32, i32, i32) {
    %c0_i32 = arith.constant 0 : i32
    %c0_i32_0 = arith.constant 0 : i32
    %c0_i32_1 = arith.constant 0 : i32
    return %arg0, %c0_i32, %c0_i32_0 : i32, i32, i32
  }
}

</mosaic_0001>

<llo_original>
// kernel: tpu_custom_call.1
$region0: #{tpu_custom_call.1}
  #allocation0 [shape = 'u32[]', space=smem, size = 0x4, offset = 0x4, fixed_abs, tag = 'smem constant byte address 0x4 - core index']
  #allocation1 [shape = 'u32[144,128]{1,0:T(1,128)}', space=vmem, size = 0x12000, scoped, tag = 'internal scratch']
  %s0 = inlined_call_operand.hbm [shape: f32[16,128], index: 0, kind: input, shape index: {}]
  %s1 = inlined_call_operand.hbm [shape: f32[16,128], index: 1, kind: input, shape index: {}]
  %s2 = inlined_call_operand.hbm [shape: f32[1,8,128], index: 2, kind: output, shape index: {}]
  %s3 = sld [smem:[#allocation0]]
  $region38: #{tpu_custom_call.1} parent=0
    _
  %s5 = ssub.s32 1, %s3
  %s6 = scalar_select 0, %s5, %s3
  $region1: #{tpu_custom_call.1} parent=0
    #allocation2 [shape = 'u8[8192]{0}', space=vmem, size = 0x2000, scoped, tag = 'input window, operand 0, single buffered']
    #allocation3 [shape = 's32[1]{0}', space=sflag, size = 0x4, scoped, tag = 'scoped memory for tpu_custom_call.1']
    #allocation4 [shape = 's32[1]{0}', space=sflag, size = 0x4, scoped, tag = 'scoped memory for tpu_custom_call.1']
    #allocation5 [shape = 'u8[8192]{0}', space=vmem, size = 0x2000, scoped, tag = 'input window, operand 1, single buffered']
    #allocation6 [shape = 's32[1]{0}', space=sflag, size = 0x4, scoped, tag = 'scoped memory for tpu_custom_call.1']
    #allocation7 [shape = 'u8[4096]{0}', space=vmem, size = 0x1000, scoped, tag = 'output window, operand 0, single buffered']
    %7 = vsyncpa [#allocation3], 0
    %8 = vsyncpa [#allocation6], 0
    %9 = vsyncpa [#allocation4], 0
    // Predicated region
    $region2: #{tpu_custom_call.1} parent=1 // pred_check
      _
    $region3: #{tpu_custom_call.1} parent=1 // pred_check_branch
      %11 = sbr.rel (0) target = $region5
    $region4: #{tpu_custom_call.1} parent=1 // pred_region
      %s12 = sadd.s32 0, 0
      %p13 = scmp.lt.s32.totalorder %s12, 0
      %s14 = scalar_select %p13, %s12, 0
      %s15 = smul.u32 2, %s14
      %s17 = ssub.s32 256, 256
      %18 = vsyncadd [#allocation3], %s17
      %s19 = smul.addr %s15, 128
      %s20 = scalar_lea.hbm %s0, %s19
      %s21 = sshll.u32 [#allocation2], 4
      %s22 = int_to_ptr.vmem [resolvable:$true] %s21
      %27 = dma.hbm_to_vmem [thread:$0]  %s20, 256, %s22, [#allocation3], 128, 128, 8
    $region5: #{tpu_custom_call.1} parent=1 // pred_fallthru
      _
    // Predicated region
    $region6: #{tpu_custom_call.1} parent=1 // pred_check
      _
    $region7: #{tpu_custom_call.1} parent=1 // pred_check_branch
      %29 = sbr.rel (0) target = $region9
    $region8: #{tpu_custom_call.1} parent=1 // pred_region
      %s30 = sadd.s32 0, 0
      %p31 = scmp.lt.s32.totalorder %s30, 0
      %s32 = scalar_select %p31, %s30, 0
      %s33 = smul.u32 2, %s32
      %s35 = ssub.s32 256, 256
      %36 = vsyncadd [#allocation6], %s35
      %s37 = smul.addr %s33, 128
      %s38 = scalar_lea.hbm %s1, %s37
      %s39 = sshll.u32 [#allocation5], 4
      %s40 = int_to_ptr.vmem [resolvable:$true] %s39
      %45 = dma.hbm_to_vmem [thread:$0]  %s38, 256, %s40, [#allocation6], 128, 128, 8
    $region9: #{tpu_custom_call.1} parent=1 // pred_fallthru
      _
    // Predicated region
    $region10: #{tpu_custom_call.1} parent=1 // pred_check
      _
    $region11: #{tpu_custom_call.1} parent=1 // pred_check_branch
      %47 = sbr.rel (0) target = $region13
    $region12: #{tpu_custom_call.1} parent=1 // pred_region
      %48 = dma.done [#allocation3], 256
    $region13: #{tpu_custom_call.1} parent=1 // pred_fallthru
      _
    // Predicated region
    $region14: #{tpu_custom_call.1} parent=1 // pred_check
      _
    $region15: #{tpu_custom_call.1} parent=1 // pred_check_branch
      %50 = sbr.rel (0) target = $region17
    $region16: #{tpu_custom_call.1} parent=1 // pred_region
      %51 = dma.done [#allocation6], 256
    $region17: #{tpu_custom_call.1} parent=1 // pred_fallthru
      _
    %s52 = sadd.s32 0, 0
    %p53 = scmp.lt.s32.totalorder %s52, 0
    %s54 = scalar_select %p53, %s52, 0
    %s55 = smul.u32 2, %s54
    %s56 = sadd.s32 0, 0
    %p57 = scmp.lt.s32.totalorder %s56, 0
    %s58 = scalar_select %p57, %s56, 0
    %s59 = smul.u32 2, %s58
    %p60 = scmp.eq.s32.totalorder 0, 0
    // Predicated region
    $region18: #{tpu_custom_call.1} parent=1 // pred_check
      %p61 = pneg %p60
    $region19: #{tpu_custom_call.1} parent=1 // pred_check_branch
      %63 = sbr.rel (%p61) target = $region21
    $region20: #{tpu_custom_call.1} parent=1 // pred_region
      %64 = vst [vmem:[#allocation7] sm:$0xff] 0.0
    $region21: #{tpu_custom_call.1} parent=1 // pred_fallthru
      _
    %v65 = vld [vmem:[#allocation2] sm:$0xff]
    %v66 = vld [vmem:[#allocation2 + $0x8] sm:$0xff]
    %v67 = vld [vmem:[#allocation5] sm:$0xff]
    %v68 = vld [vmem:[#allocation5 + $0x8] sm:$0xff]
    %v69 = vadd.f32 %v67, 0.01
    %v70 = vadd.f32 %v68, 0.01
    %v71 = vsub.f32 %v65, %v67
    %v72 = vsub.f32 %v66, %v68
    %v73 = vrcp.pop %v69
    %v74 = vmul.f32 %v71, %v73
    %v75 = vrcp.pop %v70
    %v76 = vmul.f32 %v72, %v75
    %v77 = vand.u32 2147483647, %v74
    %v78 = vand.u32 2147483647, %v76
    %s79 = sadd.s32 0, 0
    %s80 = smul.u32 %s79, 16
    %s81 = sadd.s32 %s80, 16
    %p82 = scmp.gt.s32.totalorder %s81, 16
    %p83 = scmp.le.s32.totalorder %s81, 16
    // Predicated region
    $region22: #{tpu_custom_call.1} parent=1 // pred_check
      %p84 = pneg %p83
    $region23: #{tpu_custom_call.1} parent=1 // pred_check_branch
      %86 = sbr.rel (%p84) target = $region25
    $region24: #{tpu_custom_call.1} parent=1 // pred_region
      %v87 = vadd.f32 %v77, %v78
      %v88 = vld [vmem:[#allocation7] sm:$0xff]
      %v89 = vadd.f32 %v88, %v87
      %90 = vst [vmem:[#allocation7] sm:$0xff] %v89
    $region25: #{tpu_custom_call.1} parent=1 // pred_fallthru
      _
    // Predicated region
    $region26: #{tpu_custom_call.1} parent=1 // pred_check
      %p91 = pneg %p82
    $region27: #{tpu_custom_call.1} parent=1 // pred_check_branch
      %93 = sbr.rel (%p91) target = $region29
    $region28: #{tpu_custom_call.1} parent=1 // pred_region
      %v94 = vlaneseq
      %v95 = vshrl.u32 %v94, 7
      %v96 = vadd.s32 %v95, 8
      %v97 = vstv %s80
      %v98 = vadd.s32 %v95, %v97
      %v99 = vadd.s32 %v96, %v97
      %vm100 = vcmp.lt.s32.totalorder %v98, 16
      %vm101 = vcmp.lt.s32.totalorder %v99, 16
      %v102 = vsel %vm100, %v77, 0.0
      %v103 = vsel %vm101, %v78, 0.0
      %v104 = vadd.f32 %v102, %v103
      %v105 = vld [vmem:[#allocation7] sm:$0xff]
      %v106 = vadd.f32 %v105, %v104
      %107 = vst [vmem:[#allocation7] sm:$0xff] %v106
    $region29: #{tpu_custom_call.1} parent=1 // pred_fallthru
      _
    // Predicated region
    $region30: #{tpu_custom_call.1} parent=1 // pred_check
      _
    $region31: #{tpu_custom_call.1} parent=1 // pred_check_branch
      %109 = sbr.rel (0) target = $region33
    $region32: #{tpu_custom_call.1} parent=1 // pred_region
      %s111 = ssub.s32 128, 128
      %112 = vsyncadd [#allocation4], %s111
      %s114 = sshll.u32 [#allocation7], 4
      %s115 = int_to_ptr.vmem [resolvable:$true] %s114
      %117 = dma.vmem_to_hbm [thread:$0]  %s115, 128, %s2, [#allocation4]
    $region33: #{tpu_custom_call.1} parent=1 // pred_fallthru
      _
    // Predicated region
    $region34: #{tpu_custom_call.1} parent=1 // pred_check
      _
    $region35: #{tpu_custom_call.1} parent=1 // pred_check_branch
      %119 = sbr.rel (0) target = $region37
    $region36: #{tpu_custom_call.1} parent=1 // pred_region
      %120 = dma.done [#allocation4], 128
    $region37: #{tpu_custom_call.1} parent=1 // pred_fallthru
      _
    %121 = vsyncpa [#allocation3], 1
    %122 = vsyncpa [#allocation6], 1
    %123 = vsyncpa [#allocation4], 1

</llo_original>
